<compile_context>
chip_gen: v7x
topology: tpu7x:2x2x1
jax: 0.10.0
libtpu: 0.0.40
codegen_flags: <defaults>
</compile_context>

<pallas_src>
import functools

import jax
import jax.numpy as jnp
from jax.experimental import pallas as pl
from jax.experimental.pallas import tpu as pltpu


def _vq_kernel(x_ref, e1_ref, e1t_ref, e1sq_ref, e2_ref, e2t_ref, e2sq_ref,
               q_ref, loss_ref, *, n_valid, tile_n, need_mask):
    x = x_ref[...].astype(jnp.float32)              # (TN, D)
    tn = x.shape[0]
    k = e1_ref.shape[0]

    # Column-index iota, built ONCE and reused for both codebooks
    # (JAX does not CSE broadcast_in_dim).
    col = jax.lax.broadcasted_iota(jnp.int32, (tn, k), 1)

    def quantize(flat, emb_ref, embt_ref, embsq_ref):
        emb = emb_ref[...].astype(jnp.float32)      # (K, D)  gather matmul
        emb_t = embt_ref[...].astype(jnp.float32)   # (D, K)  distance matmul
        # ||x||^2 term dropped: argmin over K is invariant to per-row consts.
        dist = embsq_ref[...] - 2.0 * jnp.dot(
            flat, emb_t, preferred_element_type=jnp.float32)         # (TN, K)
        min_dist = jnp.min(dist, axis=1, keepdims=True)              # (TN, 1)
        # First-occurrence tie-break (matches torch.argmin).
        masked_col = jnp.where(dist == min_dist, col, k)             # int32
        inds = jnp.min(masked_col, axis=1, keepdims=True)            # (TN, 1)
        one_hot = (masked_col == inds).astype(jnp.float32)           # (TN, K)
        # quantized = one_hot @ emb  (the scatter_+matmul in torch)
        return jnp.dot(one_hot, emb, preferred_element_type=jnp.float32)

    q1 = quantize(x, e1_ref, e1t_ref, e1sq_ref)
    q2 = quantize(x - q1, e2_ref, e2t_ref, e2sq_ref)
    q = q1 + q2

    q_ref[...] = q.astype(q_ref.dtype)

    # Per-tile partial sum of squared error; padded rows masked out.
    diff = q - x
    sq = jnp.sum(diff * diff, axis=1, keepdims=True)                 # (TN, 1)
    if need_mask:
        row = (jax.lax.broadcasted_iota(jnp.int32, (tn, 1), 0)
               + pl.program_id(0) * tile_n)
        sq = jnp.where(row < n_valid, sq, 0.0)
    loss_ref[0, 0] = jnp.sum(sq)


def _round_up(a, b):
    return -(-a // b) * b


def vector_quantizer(latents, emb1, emb2, beta=0.25, tile_n=1024):
    """latents: (B, H, W, D) channels-last. Returns (quantized, vq_loss).

    tile_n defaults to 1024 (safe within the default scoped-VMEM budget on
    v5e/v6e/v7x); raise toward 2048-4096 on v6e with a larger
    vmem_limit_bytes if desired.
    """
    latents_shape = latents.shape
    k, d = emb1.shape
    flat = latents.reshape(-1, d)
    n = flat.shape[0]

    tn = min(tile_n, _round_up(n, 8))          # multiple of 8 (sublanes)
    n_pad = _round_up(n, tn)
    if n_pad != n:
        flat = jnp.pad(flat, ((0, n_pad - n), (0, 0)))
    num_tiles = n_pad // tn

    # Hoisted codebook preprocessing (resident across the grid).
    e1 = emb1.astype(jnp.float32)
    e2 = emb2.astype(jnp.float32)
    e1_t = e1.T                                 # (D, K)
    e2_t = e2.T
    e1_sq = jnp.sum(e1 * e1, axis=1)[None, :]   # (1, K)
    e2_sq = jnp.sum(e2 * e2, axis=1)[None, :]

    kernel = functools.partial(
        _vq_kernel, n_valid=n, tile_n=tn, need_mask=(n_pad != n))

    q_flat, partial = pl.pallas_call(
        kernel,
        out_shape=(
            jax.ShapeDtypeStruct((n_pad, d), latents.dtype),
            jax.ShapeDtypeStruct((num_tiles, 1), jnp.float32),
        ),
        grid=(num_tiles,),
        in_specs=[
            pl.BlockSpec((tn, d), lambda i: (i, 0)),    # x tile (pipelined)
            pl.BlockSpec((k, d), lambda i: (0, 0)),     # emb1 (resident)
            pl.BlockSpec((d, k), lambda i: (0, 0)),     # emb1^T
            pl.BlockSpec((1, k), lambda i: (0, 0)),     # ||emb1||^2
            pl.BlockSpec((k, d), lambda i: (0, 0)),     # emb2
            pl.BlockSpec((d, k), lambda i: (0, 0)),     # emb2^T
            pl.BlockSpec((1, k), lambda i: (0, 0)),     # ||emb2||^2
        ],
        out_specs=(
            pl.BlockSpec((tn, d), lambda i: (i, 0)),
            pl.BlockSpec((1, 1), lambda i: (i, 0), memory_space=pltpu.SMEM),
        ),
        compiler_params=pltpu.CompilerParams(
            dimension_semantics=("parallel",)),
    )(flat, e1, e1_t, e1_sq, e2, e2_t, e2_sq)

    q = q_flat[:n].reshape(latents_shape)
    mse = jnp.sum(partial) / (n * d)
    # commitment_loss = mse(q.detach(), x); embedding_loss = mse(q, x.detach())
    # Both evaluate to the same value in the forward pass.
    vq_loss = mse * beta + mse
    return q, vq_loss


def _reference(latents, emb1, emb2, beta=0.25):
    """Pure-JAX reference mirroring the PyTorch forward for verification."""
    shape = latents.shape
    d = emb1.shape[1]
    flat = latents.reshape(-1, d).astype(jnp.float32)

    def quantize(flat, emb):
        dist = (
            jnp.sum(flat ** 2, axis=1, keepdims=True)
            + jnp.sum(emb ** 2, axis=1)
            - 2.0 * flat @ emb.T
        )
        inds = jnp.argmin(dist, axis=1)
        one_hot = jax.nn.one_hot(inds, emb.shape[0], dtype=jnp.float32)
        return one_hot @ emb

    q1 = quantize(flat, emb1.astype(jnp.float32))
    q2 = quantize(flat - q1, emb2.astype(jnp.float32))
    q = (q1 + q2).reshape(shape)
    mse = jnp.mean((q - latents) ** 2)
    return q, mse * beta + mse


if __name__ == "__main__":
    # Module hyperparameters (synthetic, deterministic).
    K = 128   # num_embeddings
    D = 32    # embedding_dim
    beta = 0.25

    key = jax.random.PRNGKey(0)
    k_lat, k_lat2, k_e1, k_e2 = jax.random.split(key, 4)

    # embedding weights ~ U(-1/K, 1/K), matching uniform_(-1/K, 1/K)
    emb1 = jax.random.uniform(k_e1, (K, D), jnp.float32, -1.0 / K, 1.0 / K)
    emb2 = jax.random.uniform(k_e2, (K, D), jnp.float32, -1.0 / K, 1.0 / K)

    # Case 1: canonical small shape (B, H, W, D) channels-last, single tile.
    latents = jax.random.normal(k_lat, (2, 4, 4, D), jnp.float32)
    quantized, vq_loss = vector_quantizer(latents, emb1, emb2, beta=beta)
    quantized = jax.block_until_ready(quantized)
    vq_loss = jax.block_until_ready(vq_loss)

    q_ref, loss_ref_v = _reference(latents, emb1, emb2, beta=beta)
    assert quantized.shape == latents.shape
    assert jnp.allclose(quantized, q_ref, atol=1e-5, rtol=1e-5)
    assert jnp.allclose(vq_loss, loss_ref_v, atol=1e-5, rtol=1e-5)

    # Case 2: forces multi-tile grid + padded tail (masked loss partials).
    latents2 = jax.random.normal(k_lat2, (2, 5, 5, D), jnp.float32)  # N = 50
    q2, loss2 = vector_quantizer(latents2, emb1, emb2, beta=beta, tile_n=16)
    q2 = jax.block_until_ready(q2)
    loss2 = jax.block_until_ready(loss2)
    q2_ref, loss2_ref = _reference(latents2, emb1, emb2, beta=beta)
    assert jnp.allclose(q2, q2_ref, atol=1e-5, rtol=1e-5)
    assert jnp.allclose(loss2, loss2_ref, atol=1e-5, rtol=1e-5)

    print("KERNEL_OK")
</pallas_src>

<mosaic_0001>
module attributes {stable_mosaic.version = 11 : i64} {
  func.func @_vq_kernel(%arg0: i32, %arg1: memref<32x32xf32, #tpu.memory_space<vmem>>, %arg2: memref<128x32xf32, #tpu.memory_space<vmem>>, %arg3: memref<32x128xf32, #tpu.memory_space<vmem>>, %arg4: memref<1x128xf32, #tpu.memory_space<vmem>>, %arg5: memref<128x32xf32, #tpu.memory_space<vmem>>, %arg6: memref<32x128xf32, #tpu.memory_space<vmem>>, %arg7: memref<1x128xf32, #tpu.memory_space<vmem>>, %arg8: memref<32x32xf32, #tpu.memory_space<vmem>>, %arg9: memref<1x1xf32, #tpu.memory_space<smem>>) attributes {dimension_semantics = [#tpu.dimension_semantics<parallel>], iteration_bounds = array<i64: 1>, scalar_prefetch = 0 : i64, scratch_operands = 0 : i64, tpu.core_type = #tpu.core_type<tc>, window_params = [{transform_indices = @transform_0, window_bounds = array<i64: 32, 32>}, {pipeline_mode = #tpu.pipeline_mode<synchronous>, transform_indices = @transform_1, window_bounds = array<i64: 128, 32>}, {pipeline_mode = #tpu.pipeline_mode<synchronous>, transform_indices = @transform_2, window_bounds = array<i64: 32, 128>}, {pipeline_mode = #tpu.pipeline_mode<synchronous>, transform_indices = @transform_3, window_bounds = array<i64: 1, 128>}, {pipeline_mode = #tpu.pipeline_mode<synchronous>, transform_indices = @transform_4, window_bounds = array<i64: 128, 32>}, {pipeline_mode = #tpu.pipeline_mode<synchronous>, transform_indices = @transform_5, window_bounds = array<i64: 32, 128>}, {pipeline_mode = #tpu.pipeline_mode<synchronous>, transform_indices = @transform_6, window_bounds = array<i64: 1, 128>}, {transform_indices = @transform_7, window_bounds = array<i64: 32, 32>}, {transform_indices = @transform_8, window_bounds = array<i64: 1, 1>}]} {
    %c0 = arith.constant 0 : index
    %c0_0 = arith.constant 0 : index
    %0 = vector.load %arg1[%c0, %c0_0] : memref<32x32xf32, #tpu.memory_space<vmem>>, vector<32x32xf32>
    %1 = tpu.iota {dimensions = array<i32: 1>} : vector<32x128xi32>
    %c0_1 = arith.constant 0 : index
    %c0_2 = arith.constant 0 : index
    %2 = vector.load %arg2[%c0_1, %c0_2] : memref<128x32xf32, #tpu.memory_space<vmem>>, vector<128x32xf32>
    %c0_3 = arith.constant 0 : index
    %c0_4 = arith.constant 0 : index
    %3 = vector.load %arg3[%c0_3, %c0_4] : memref<32x128xf32, #tpu.memory_space<vmem>>, vector<32x128xf32>
    %c0_5 = arith.constant 0 : index
    %c0_6 = arith.constant 0 : index
    %4 = vector.load %arg4[%c0_5, %c0_6] : memref<1x128xf32, #tpu.memory_space<vmem>>, vector<1x128xf32>
    %cst = arith.constant dense<0.000000e+00> : vector<32x128xf32>
    %5 = tpu.matmul %0, %3, %cst {dimension_numbers = #tpu.dot_dimension_numbers<[1], [0], [0], [1], [0, 0, 1, 1], [], []>} : vector<32x32xf32>, vector<32x128xf32>, vector<32x128xf32> -> vector<32x128xf32>
    %cst_7 = arith.constant 2.000000e+00 : f32
    %6 = vector.broadcast %cst_7 : f32 to vector<32x128xf32>
    %7 = arith.mulf %6, %5 : vector<32x128xf32>
    %8 = vector.broadcast %4 : vector<1x128xf32> to vector<32x128xf32>
    %9 = arith.subf %8, %7 : vector<32x128xf32>
    %cst_8 = arith.constant dense<0x7F800000> : vector<32xf32>
    %10 = vector.multi_reduction <minimumf>, %9, %cst_8 [1] : vector<32x128xf32> to vector<32xf32>
    %11 = vector.shape_cast %10 : vector<32xf32> to vector<32x1xf32>
    %12 = vector.broadcast %11 : vector<32x1xf32> to vector<32x128xf32>
    %13 = arith.cmpf oeq, %9, %12 : vector<32x128xf32>
    %c128_i32 = arith.constant 128 : i32
    %14 = vector.broadcast %c128_i32 : i32 to vector<32x128xi32>
    %15 = arith.select %13, %1, %14 : vector<32x128xi1>, vector<32x128xi32>
    %cst_9 = arith.constant dense<2147483647> : vector<32xi32>
    %16 = vector.multi_reduction <minsi>, %15, %cst_9 [1] : vector<32x128xi32> to vector<32xi32>
    %17 = vector.shape_cast %16 : vector<32xi32> to vector<32x1xi32>
    %18 = vector.broadcast %17 : vector<32x1xi32> to vector<32x128xi32>
    %19 = arith.cmpi eq, %15, %18 : vector<32x128xi32>
    %20 = arith.extui %19 : vector<32x128xi1> to vector<32x128xi32>
    %21 = arith.sitofp %20 : vector<32x128xi32> to vector<32x128xf32>
    %cst_10 = arith.constant dense<0.000000e+00> : vector<32x32xf32>
    %22 = tpu.matmul %21, %2, %cst_10 {dimension_numbers = #tpu.dot_dimension_numbers<[1], [0], [0], [1], [0, 0, 1, 1], [], []>} : vector<32x128xf32>, vector<128x32xf32>, vector<32x32xf32> -> vector<32x32xf32>
    %23 = arith.subf %0, %22 : vector<32x32xf32>
    %c0_11 = arith.constant 0 : index
    %c0_12 = arith.constant 0 : index
    %24 = vector.load %arg5[%c0_11, %c0_12] : memref<128x32xf32, #tpu.memory_space<vmem>>, vector<128x32xf32>
    %c0_13 = arith.constant 0 : index
    %c0_14 = arith.constant 0 : index
    %25 = vector.load %arg6[%c0_13, %c0_14] : memref<32x128xf32, #tpu.memory_space<vmem>>, vector<32x128xf32>
    %c0_15 = arith.constant 0 : index
    %c0_16 = arith.constant 0 : index
    %26 = vector.load %arg7[%c0_15, %c0_16] : memref<1x128xf32, #tpu.memory_space<vmem>>, vector<1x128xf32>
    %cst_17 = arith.constant dense<0.000000e+00> : vector<32x128xf32>
    %27 = tpu.matmul %23, %25, %cst_17 {dimension_numbers = #tpu.dot_dimension_numbers<[1], [0], [0], [1], [0, 0, 1, 1], [], []>} : vector<32x32xf32>, vector<32x128xf32>, vector<32x128xf32> -> vector<32x128xf32>
    %cst_18 = arith.constant 2.000000e+00 : f32
    %28 = vector.broadcast %cst_18 : f32 to vector<32x128xf32>
    %29 = arith.mulf %28, %27 : vector<32x128xf32>
    %30 = vector.broadcast %26 : vector<1x128xf32> to vector<32x128xf32>
    %31 = arith.subf %30, %29 : vector<32x128xf32>
    %cst_19 = arith.constant dense<0x7F800000> : vector<32xf32>
    %32 = vector.multi_reduction <minimumf>, %31, %cst_19 [1] : vector<32x128xf32> to vector<32xf32>
    %33 = vector.shape_cast %32 : vector<32xf32> to vector<32x1xf32>
    %34 = vector.broadcast %33 : vector<32x1xf32> to vector<32x128xf32>
    %35 = arith.cmpf oeq, %31, %34 : vector<32x128xf32>
    %c128_i32_20 = arith.constant 128 : i32
    %36 = vector.broadcast %c128_i32_20 : i32 to vector<32x128xi32>
    %37 = arith.select %35, %1, %36 : vector<32x128xi1>, vector<32x128xi32>
    %cst_21 = arith.constant dense<2147483647> : vector<32xi32>
    %38 = vector.multi_reduction <minsi>, %37, %cst_21 [1] : vector<32x128xi32> to vector<32xi32>
    %39 = vector.shape_cast %38 : vector<32xi32> to vector<32x1xi32>
    %40 = vector.broadcast %39 : vector<32x1xi32> to vector<32x128xi32>
    %41 = arith.cmpi eq, %37, %40 : vector<32x128xi32>
    %42 = arith.extui %41 : vector<32x128xi1> to vector<32x128xi32>
    %43 = arith.sitofp %42 : vector<32x128xi32> to vector<32x128xf32>
    %cst_22 = arith.constant dense<0.000000e+00> : vector<32x32xf32>
    %44 = tpu.matmul %43, %24, %cst_22 {dimension_numbers = #tpu.dot_dimension_numbers<[1], [0], [0], [1], [0, 0, 1, 1], [], []>} : vector<32x128xf32>, vector<128x32xf32>, vector<32x32xf32> -> vector<32x32xf32>
    %45 = arith.addf %22, %44 : vector<32x32xf32>
    %c0_23 = arith.constant 0 : index
    %c0_24 = arith.constant 0 : index
    %46 = vector.load %arg8[%c0_23, %c0_24] : memref<32x32xf32, #tpu.memory_space<vmem>>, vector<32x32xf32>
    tpu.vector_store %arg8[%c0_23, %c0_24], %45 {strides = array<i32>} : memref<32x32xf32, #tpu.memory_space<vmem>>, vector<32x32xf32>,
    %47 = arith.subf %45, %0 : vector<32x32xf32>
    %48 = arith.mulf %47, %47 : vector<32x32xf32>
    %cst_25 = arith.constant dense<0.000000e+00> : vector<32xf32>
    %49 = vector.multi_reduction <add>, %48, %cst_25 [1] : vector<32x32xf32> to vector<32xf32>
    %50 = vector.shape_cast %49 : vector<32xf32> to vector<32x1xf32>
    %51 = vector.shape_cast %50 : vector<32x1xf32> to vector<1x32x1xf32>
    %cst_26 = arith.constant dense<0.000000e+00> : vector<1xf32>
    %52 = vector.multi_reduction <add>, %51, %cst_26 [1, 2] : vector<1x32x1xf32> to vector<1xf32>
    %53 = vector.shape_cast %52 : vector<1xf32> to vector<1x1x1xf32>
    %54 = vector.extract %53[0, 0, 0] : f32 from vector<1x1x1xf32>
    %c0_27 = arith.constant 0 : index
    %c0_28 = arith.constant 0 : index
    %55 = memref.load %arg9[%c0_27, %c0_28] : memref<1x1xf32, #tpu.memory_space<smem>>
    memref.store %54, %arg9[%c0_27, %c0_28] : memref<1x1xf32, #tpu.memory_space<smem>>
    return
  }
  func.func @transform_0(%arg0: i32) -> (i32, i32) {
    %c0_i32 = arith.constant 0 : i32
    %c0_i32_0 = arith.constant 0 : i32
    return %arg0, %c0_i32 : i32, i32
  }
  func.func @transform_1(%arg0: i32) -> (i32, i32) {
    %c0_i32 = arith.constant 0 : i32
    %c0_i32_0 = arith.constant 0 : i32
    %c0_i32_1 = arith.constant 0 : i32
    return %c0_i32, %c0_i32_0 : i32, i32
  }
  func.func @transform_2(%arg0: i32) -> (i32, i32) {
    %c0_i32 = arith.constant 0 : i32
    %c0_i32_0 = arith.constant 0 : i32
    %c0_i32_1 = arith.constant 0 : i32
    return %c0_i32, %c0_i32_0 : i32, i32
  }
  func.func @transform_3(%arg0: i32) -> (i32, i32) {
    %c0_i32 = arith.constant 0 : i32
    %c0_i32_0 = arith.constant 0 : i32
    %c0_i32_1 = arith.constant 0 : i32
    return %c0_i32, %c0_i32_0 : i32, i32
  }
  func.func @transform_4(%arg0: i32) -> (i32, i32) {
    %c0_i32 = arith.constant 0 : i32
    %c0_i32_0 = arith.constant 0 : i32
    %c0_i32_1 = arith.constant 0 : i32
    return %c0_i32, %c0_i32_0 : i32, i32
  }
  func.func @transform_5(%arg0: i32) -> (i32, i32) {
    %c0_i32 = arith.constant 0 : i32
    %c0_i32_0 = arith.constant 0 : i32
    %c0_i32_1 = arith.constant 0 : i32
    return %c0_i32, %c0_i32_0 : i32, i32
  }
  func.func @transform_6(%arg0: i32) -> (i32, i32) {
    %c0_i32 = arith.constant 0 : i32
    %c0_i32_0 = arith.constant 0 : i32
    %c0_i32_1 = arith.constant 0 : i32
    return %c0_i32, %c0_i32_0 : i32, i32
  }
  func.func @transform_7(%arg0: i32) -> (i32, i32) {
    %c0_i32 = arith.constant 0 : i32
    %c0_i32_0 = arith.constant 0 : i32
    return %arg0, %c0_i32 : i32, i32
  }
  func.func @transform_8(%arg0: i32) -> (i32, i32) {
    %c0_i32 = arith.constant 0 : i32
    %c0_i32_0 = arith.constant 0 : i32
    return %arg0, %c0_i32 : i32, i32
  }
}

</mosaic_0001>

<llo_original>
// kernel: tpu_custom_call.1
$region0: #{tpu_custom_call.1}
  #allocation0 [shape = 'u32[]', space=smem, size = 0x4, offset = 0x4, fixed_abs, tag = 'smem constant byte address 0x4 - core index']
  #allocation1 [shape = 'u32[144,128]{1,0:T(1,128)}', space=vmem, size = 0x12000, scoped, tag = 'internal scratch']
  %s0 = inlined_call_operand.vmem [shape: f32[32,32], index: 0, kind: input, shape index: {}]
  %s1 = inlined_call_operand.vmem [shape: f32[128,32], index: 1, kind: input, shape index: {}]
  %s2 = inlined_call_operand.vmem [shape: f32[32,128], index: 2, kind: input, shape index: {}]
  %s3 = inlined_call_operand.vmem [shape: f32[1,128], index: 3, kind: input, shape index: {}]
  %s4 = inlined_call_operand.vmem [shape: f32[128,32], index: 4, kind: input, shape index: {}]
  %s5 = inlined_call_operand.vmem [shape: f32[32,128], index: 5, kind: input, shape index: {}]
  %s6 = inlined_call_operand.vmem [shape: f32[1,128], index: 6, kind: input, shape index: {}]
  %s7 = inlined_call_operand.hbm [shape: f32[32,32], index: 7, kind: output, shape index: {0}]
  %s8 = inlined_call_operand.hbm [shape: f32[1,1], index: 8, kind: output, shape index: {1}]
  %9 = xla_tuple %s7, %s8
  %s10 = sld [smem:[#allocation0]]
  $region46: #{tpu_custom_call.1} parent=0
    _
  %s12 = ssub.s32 1, %s10
  %s13 = scalar_select 0, %s12, %s10
  $region1: #{tpu_custom_call.1} parent=0
    #allocation2 [shape = 'u8[16384]{0}', space=vmem, size = 0x4000, scoped, tag = 'output window, operand 0, single buffered']
    #allocation3 [shape = 's32[1]{0}', space=sflag, size = 0x4, scoped, tag = 'scoped memory for tpu_custom_call.1']
    #allocation4 [shape = 's32[1]{0}', space=sflag, size = 0x4, scoped, tag = 'scoped memory for tpu_custom_call.1']
    #allocation5 [shape = 'u8[512]{0}', space=smem, size = 0x200, scoped, tag = 'output window, operand 1, single buffered']
    %14 = vsyncpa [#allocation3], 0
    %15 = vsyncpa [#allocation4], 0
    // Predicated region
    $region2: #{tpu_custom_call.1} parent=1 // pred_check
      _
    $region3: #{tpu_custom_call.1} parent=1 // pred_check_branch
      %17 = sbr.rel (0) target = $region5
    $region4: #{tpu_custom_call.1} parent=1 // pred_region
      _
    $region5: #{tpu_custom_call.1} parent=1 // pred_fallthru
      _
    // Predicated region
    $region6: #{tpu_custom_call.1} parent=1 // pred_check
      _
    $region7: #{tpu_custom_call.1} parent=1 // pred_check_branch
      %19 = sbr.rel (0) target = $region9
    $region8: #{tpu_custom_call.1} parent=1 // pred_region
      _
    $region9: #{tpu_custom_call.1} parent=1 // pred_fallthru
      _
    // Predicated region
    $region10: #{tpu_custom_call.1} parent=1 // pred_check
      _
    $region11: #{tpu_custom_call.1} parent=1 // pred_check_branch
      %21 = sbr.rel (0) target = $region13
    $region12: #{tpu_custom_call.1} parent=1 // pred_region
      _
    $region13: #{tpu_custom_call.1} parent=1 // pred_fallthru
      _
    // Predicated region
    $region14: #{tpu_custom_call.1} parent=1 // pred_check
      _
    $region15: #{tpu_custom_call.1} parent=1 // pred_check_branch
      %23 = sbr.rel (0) target = $region17
    $region16: #{tpu_custom_call.1} parent=1 // pred_region
      _
    $region17: #{tpu_custom_call.1} parent=1 // pred_fallthru
      _
    // Predicated region
    $region18: #{tpu_custom_call.1} parent=1 // pred_check
      _
    $region19: #{tpu_custom_call.1} parent=1 // pred_check_branch
      %25 = sbr.rel (0) target = $region21
    $region20: #{tpu_custom_call.1} parent=1 // pred_region
      _
    $region21: #{tpu_custom_call.1} parent=1 // pred_fallthru
      _
    // Predicated region
    $region22: #{tpu_custom_call.1} parent=1 // pred_check
      _
    $region23: #{tpu_custom_call.1} parent=1 // pred_check_branch
      %27 = sbr.rel (0) target = $region25
    $region24: #{tpu_custom_call.1} parent=1 // pred_region
      _
    $region25: #{tpu_custom_call.1} parent=1 // pred_fallthru
      _
    // Predicated region
    $region26: #{tpu_custom_call.1} parent=1 // pred_check
      _
    $region27: #{tpu_custom_call.1} parent=1 // pred_check_branch
      %29 = sbr.rel (0) target = $region29
    $region28: #{tpu_custom_call.1} parent=1 // pred_region
      _
    $region29: #{tpu_custom_call.1} parent=1 // pred_fallthru
      _
    %v30 = vld [vmem:[%s0] sm:$0xff]
    %v31 = vld [vmem:[%s0 + $0x8] sm:$0xff]
    %v32 = vld [vmem:[%s0 + $0x10] sm:$0xff]
    %v33 = vld [vmem:[%s0 + $0x18] sm:$0xff]
    %v34 = vlaneseq
    %v35 = vand.u32 %v34, 127
    %v36 = vld [vmem:[%s1] sm:$0xff]
    %v37 = vld [vmem:[%s1 + $0x8] sm:$0xff]
    %v38 = vld [vmem:[%s1 + $0x10] sm:$0xff]
    %v39 = vld [vmem:[%s1 + $0x18] sm:$0xff]
    %v40 = vld [vmem:[%s1 + $0x20] sm:$0xff]
    %v41 = vld [vmem:[%s1 + $0x28] sm:$0xff]
    %v42 = vld [vmem:[%s1 + $0x30] sm:$0xff]
    %v43 = vld [vmem:[%s1 + $0x38] sm:$0xff]
    %v44 = vld [vmem:[%s1 + $0x40] sm:$0xff]
    %v45 = vld [vmem:[%s1 + $0x48] sm:$0xff]
    %v46 = vld [vmem:[%s1 + $0x50] sm:$0xff]
    %v47 = vld [vmem:[%s1 + $0x58] sm:$0xff]
    %v48 = vld [vmem:[%s1 + $0x60] sm:$0xff]
    %v49 = vld [vmem:[%s1 + $0x68] sm:$0xff]
    %v50 = vld [vmem:[%s1 + $0x70] sm:$0xff]
    %v51 = vld [vmem:[%s1 + $0x78] sm:$0xff]
    %v52 = vld [vmem:[%s2] sm:$0xff]
    %v53 = vld [vmem:[%s2 + $0x8] sm:$0xff]
    %v54 = vld [vmem:[%s2 + $0x10] sm:$0xff]
    %v55 = vld [vmem:[%s2 + $0x18] sm:$0xff]
    %v56 = vld [vmem:[%s3] sm:$0x1]
    %vm57 = vcmask 261120
    %v59 = vsel %vm57, %v30, 0
    %v62 = vsel %vm57, %v31, 0
    %v65 = vsel %vm57, %v32, 0
    %v68 = vsel %vm57, %v33, 0
    %70 = vmatprep.subr.mxu0 0.0
    %71 = vmatpush1.msra.mxu0 %v52
    %72 = vmatprep.subr.mxu0 0.0
    %73 = vmatpush1.msra.mxu0 %v53
    %74 = vmatprep.subr.mxu0 0.0
    %75 = vmatpush1.msra.mxu0 %v54
    %76 = vmatprep.subr.mxu0 0.0
    %77 = vmatpush1.msra.mxu0 %v55
    %78 = vmatprep.subr.mxu0 0.0
    %79 = vmatpush1.msra.mxu0 0.0
    %80 = vmatprep.subr.mxu0 0.0
    %81 = vmatpush1.msra.mxu0 0.0
    %82 = vmatprep.subr.mxu0 0.0
    %83 = vmatpush1.msra.mxu0 0.0
    %84 = vmatprep.subr.mxu0 0.0
    %85 = vmatpush1.msra.mxu0 0.0
    %86 = vmatprep.subr.mxu0 0.0
    %87 = vmatpush1.msra.mxu0 0.0
    %88 = vmatprep.subr.mxu0 0.0
    %89 = vmatpush1.msra.mxu0 0.0
    %90 = vmatprep.subr.mxu0 0.0
    %91 = vmatpush1.msra.mxu0 0.0
    %92 = vmatprep.subr.mxu0 0.0
    %93 = vmatpush1.msra.mxu0 0.0
    %94 = vmatprep.subr.mxu0 0.0
    %95 = vmatpush1.msra.mxu0 0.0
    %96 = vmatprep.subr.mxu0 0.0
    %97 = vmatpush1.msra.mxu0 0.0
    %98 = vmatprep.subr.mxu0 0.0
    %99 = vmatpush1.msra.mxu0 0.0
    %100 = vmatprep.subr.mxu0 0.0
    %101 = vmatpush1.msra.mxu0 0.0
    %102 = vmatprep.subr.mxu0 0.0
    %103 = vmatpush1.msra.mxu0 0.0
    %104 = vmatprep.subr.mxu0 0.0
    %105 = vmatpush1.msra.mxu0 0.0
    %106 = vmatprep.subr.mxu0 0.0
    %107 = vmatpush1.msra.mxu0 0.0
    %108 = vmatprep.subr.mxu0 0.0
    %109 = vmatpush1.msra.mxu0 0.0
    %110 = vmatprep.subr.mxu0 0.0
    %111 = vmatpush1.msra.mxu0 0.0
    %112 = vmatprep.subr.mxu0 0.0
    %113 = vmatpush1.msra.mxu0 0.0
    %114 = vmatprep.subr.mxu0 0.0
    %115 = vmatpush1.msra.mxu0 0.0
    %116 = vmatprep.subr.mxu0 0.0
    %117 = vmatpush1.msra.mxu0 0.0
    %118 = vmatprep.subr.mxu0 0.0
    %119 = vmatpush1.msra.mxu0 0.0
    %120 = vmatprep.subr.mxu0 0.0
    %121 = vmatpush1.msra.mxu0 0.0
    %122 = vmatprep.subr.mxu0 0.0
    %123 = vmatpush1.msra.mxu0 0.0
    %124 = vmatprep.subr.mxu0 0.0
    %125 = vmatpush1.msra.mxu0 0.0
    %126 = vmatprep.subr.mxu0 0.0
    %127 = vmatpush1.msra.mxu0 0.0
    %128 = vmatprep.subr.mxu0 0.0
    %129 = vmatpush1.msra.mxu0 0.0
    %130 = vmatprep.subr.mxu0 0.0
    %131 = vmatpush1.msra.mxu0 0.0
    %132 = vmatprep.subr.mxu0 0.0
    %133 = vmatpush1.msra.mxu0 0.0
    %134 = vmatprep.mubr.f32.mxu0 0.0
    %135 = vmatmul.mubr.f32.gmra.mrb[0].mxu0 %v59
    %v136 = vpop.f32.mrb[0].mxu0
    %v137 = vadd.f32 0.0, %v136
    %v138 = vpop.f32.mrb[0].mxu0
    %139 = vmatprep.mubr.f32.mxu0 0.0
    %140 = vmatmul.mubr.f32.gmra.mrb[0].mxu0 %v62
    %v141 = vpop.f32.mrb[0].mxu0
    %v142 = vadd.f32 0.0, %v141
    %v143 = vpop.f32.mrb[0].mxu0
    %144 = vmatprep.mubr.f32.mxu0 0.0
    %145 = vmatmul.mubr.f32.gmra.mrb[0].mxu0 %v65
    %v146 = vpop.f32.mrb[0].mxu0
    %v147 = vadd.f32 0.0, %v146
    %v148 = vpop.f32.mrb[0].mxu0
    %149 = vmatprep.mubr.f32.mxu0 0.0
    %150 = vmatmul.mubr.f32.gmra.mrb[0].mxu0 %v68
    %v151 = vpop.f32.mrb[0].mxu0
    %v152 = vadd.f32 0.0, %v151
    %v153 = vpop.f32.mrb[0].mxu0
    %154 = vdwg.mxu0
    %v155 = vmul.f32 %v137, 2.0
    %v156 = vmul.f32 %v142, 2.0
    %v157 = vmul.f32 %v147, 2.0
    %v158 = vmul.f32 %v152, 2.0
    %v160 = vlaneseq
    %v161 = vshrl.u32 %v160, 7
    %v162 = vsub.s32 0, %v161
    %v163 = vrot.slane %v56, %v162
    %v165 = vsub.f32 %v163, %v155
    %v166 = vsub.f32 %v163, %v156
    %v167 = vsub.f32 %v163, %v157
    %v168 = vsub.f32 %v163, %v158
    %169 = vmin.xlane.f32.xlu0 %v165
    %v170 = vpop.xlane.xlu0 %169
    %171 = vmin.xlane.f32.xlu0 %v166
    %v172 = vpop.xlane.xlu0 %171
    %173 = vmin.xlane.f32.xlu0 %v167
    %v174 = vpop.xlane.xlu0 %173
    %175 = vmin.xlane.f32.xlu0 %v168
    %v176 = vpop.xlane.xlu0 %175
    %vm177 = vcmp.eq.f32.partialorder %v165, %v170
    %vm178 = vcmp.eq.f32.partialorder %v166, %v172
    %vm179 = vcmp.eq.f32.partialorder %v167, %v174
    %vm180 = vcmp.eq.f32.partialorder %v168, %v176
    %v181 = vsel %vm177, %v35, 128
    %v182 = vsel %vm178, %v35, 128
    %v183 = vsel %vm179, %v35, 128
    %v184 = vsel %vm180, %v35, 128
    %v185 = vand.u32 %v181, 65535
    %v186 = vshra.s32 %v181, 16
    %v187 = vcvt.s32.f32 %v185
    %v188 = vcvt.s32.f32 %v186
    %189 = vmin.xlane.f32.xlu0 %v188
    %v190 = vpop.xlane.xlu0 %189
    %vm191 = vcmp.eq.f32.partialorder %v188, %v190
    %v192 = vsel %vm191, %v187, inf
    %193 = vmin.xlane.f32.xlu0 %v192
    %v194 = vpop.xlane.xlu0 %193
    %v195 = vcvt.f32.s32 %v194
    %v196 = vcvt.f32.s32 %v190
    %v197 = vshll.u32 %v196, 16
    %v198 = vadd.s32 %v197, %v195
    %v199 = vand.u32 %v182, 65535
    %v200 = vshra.s32 %v182, 16
    %v201 = vcvt.s32.f32 %v199
    %v202 = vcvt.s32.f32 %v200
    %203 = vmin.xlane.f32.xlu0 %v202
    %v204 = vpop.xlane.xlu0 %203
    %vm205 = vcmp.eq.f32.partialorder %v202, %v204
    %v206 = vsel %vm205, %v201, inf
    %207 = vmin.xlane.f32.xlu0 %v206
    %v208 = vpop.xlane.xlu0 %207
    %v209 = vcvt.f32.s32 %v208
    %v210 = vcvt.f32.s32 %v204
    %v211 = vshll.u32 %v210, 16
    %v212 = vadd.s32 %v211, %v209
    %v213 = vand.u32 %v183, 65535
    %v214 = vshra.s32 %v183, 16
    %v215 = vcvt.s32.f32 %v213
    %v216 = vcvt.s32.f32 %v214
    %217 = vmin.xlane.f32.xlu0 %v216
    %v218 = vpop.xlane.xlu0 %217
    %vm219 = vcmp.eq.f32.partialorder %v216, %v218
    %v220 = vsel %vm219, %v215, inf
    %221 = vmin.xlane.f32.xlu0 %v220
    %v222 = vpop.xlane.xlu0 %221
    %v223 = vcvt.f32.s32 %v222
    %v224 = vcvt.f32.s32 %v218
    %v225 = vshll.u32 %v224, 16
    %v226 = vadd.s32 %v225, %v223
    %v227 = vand.u32 %v184, 65535
    %v228 = vshra.s32 %v184, 16
    %v229 = vcvt.s32.f32 %v227
    %v230 = vcvt.s32.f32 %v228
    %231 = vmin.xlane.f32.xlu0 %v230
    %v232 = vpop.xlane.xlu0 %231
    %vm233 = vcmp.eq.f32.partialorder %v230, %v232
    %v234 = vsel %vm233, %v229, inf
    %235 = vmin.xlane.f32.xlu0 %v234
    %v236 = vpop.xlane.xlu0 %235
    %v237 = vcvt.f32.s32 %v236
    %v238 = vcvt.f32.s32 %v232
    %v239 = vshll.u32 %v238, 16
    %v240 = vadd.s32 %v239, %v237
    %vm241 = vcmp.eq.s32.totalorder %v181, %v198
    %vm242 = vcmp.eq.s32.totalorder %v182, %v212
    %vm243 = vcmp.eq.s32.totalorder %v183, %v226
    %vm244 = vcmp.eq.s32.totalorder %v184, %v240
    %v245 = vsel %vm241, 1, 0
    %v246 = vsel %vm242, 1, 0
    %v247 = vsel %vm243, 1, 0
    %v248 = vsel %vm244, 1, 0
    %v249 = vcvt.s32.f32 %v245
    %v250 = vcvt.s32.f32 %v246
    %v251 = vcvt.s32.f32 %v247
    %v252 = vcvt.s32.f32 %v248
    %253 = vmatprep.subr.mxu0 0.0
    %254 = vmatpush1.msra.mxu0 %v36
    %255 = vmatprep.subr.mxu0 0.0
    %256 = vmatpush1.msra.mxu0 %v37
    %257 = vmatprep.subr.mxu0 0.0
    %258 = vmatpush1.msra.mxu0 %v38
    %259 = vmatprep.subr.mxu0 0.0
    %260 = vmatpush1.msra.mxu0 %v39
    %261 = vmatprep.subr.mxu0 0.0
    %262 = vmatpush1.msra.mxu0 %v40
    %263 = vmatprep.subr.mxu0 0.0
    %264 = vmatpush1.msra.mxu0 %v41
    %265 = vmatprep.subr.mxu0 0.0
    %266 = vmatpush1.msra.mxu0 %v42
    %267 = vmatprep.subr.mxu0 0.0
    %268 = vmatpush1.msra.mxu0 %v43
    %269 = vmatprep.subr.mxu0 0.0
    %270 = vmatpush1.msra.mxu0 %v44
    %271 = vmatprep.subr.mxu0 0.0
    %272 = vmatpush1.msra.mxu0 %v45
    %273 = vmatprep.subr.mxu0 0.0
    %274 = vmatpush1.msra.mxu0 %v46
    %275 = vmatprep.subr.mxu0 0.0
    %276 = vmatpush1.msra.mxu0 %v47
    %277 = vmatprep.subr.mxu0 0.0
    %278 = vmatpush1.msra.mxu0 %v48
    %279 = vmatprep.subr.mxu0 0.0
    %280 = vmatpush1.msra.mxu0 %v49
    %281 = vmatprep.subr.mxu0 0.0
    %282 = vmatpush1.msra.mxu0 %v50
    %283 = vmatprep.subr.mxu0 0.0
    %284 = vmatpush1.msra.mxu0 %v51
    %285 = vmatprep.subr.mxu0 0.0
    %286 = vmatpush1.msra.mxu0 0.0
    %287 = vmatprep.subr.mxu0 0.0
    %288 = vmatpush1.msra.mxu0 0.0
    %289 = vmatprep.subr.mxu0 0.0
    %290 = vmatpush1.msra.mxu0 0.0
    %291 = vmatprep.subr.mxu0 0.0
    %292 = vmatpush1.msra.mxu0 0.0
    %293 = vmatprep.subr.mxu0 0.0
    %294 = vmatpush1.msra.mxu0 0.0
    %295 = vmatprep.subr.mxu0 0.0
    %296 = vmatpush1.msra.mxu0 0.0
    %297 = vmatprep.subr.mxu0 0.0
    %298 = vmatpush1.msra.mxu0 0.0
    %299 = vmatprep.subr.mxu0 0.0
    %300 = vmatpush1.msra.mxu0 0.0
    %301 = vmatprep.subr.mxu0 0.0
    %302 = vmatpush1.msra.mxu0 0.0
    %303 = vmatprep.subr.mxu0 0.0
    %304 = vmatpush1.msra.mxu0 0.0
    %305 = vmatprep.subr.mxu0 0.0
    %306 = vmatpush1.msra.mxu0 0.0
    %307 = vmatprep.subr.mxu0 0.0
    %308 = vmatpush1.msra.mxu0 0.0
    %309 = vmatprep.subr.mxu0 0.0
    %310 = vmatpush1.msra.mxu0 0.0
    %311 = vmatprep.subr.mxu0 0.0
    %312 = vmatpush1.msra.mxu0 0.0
    %313 = vmatprep.subr.mxu0 0.0
    %314 = vmatpush1.msra.mxu0 0.0
    %315 = vmatprep.subr.mxu0 0.0
    %316 = vmatpush1.msra.mxu0 0.0
    %317 = vmatprep.mubr.f32.mxu0 0.0
    %318 = vmatmul.mubr.f32.gmra.mrb[0].mxu0 %v249
    %v319 = vpop.f32.mrb[0].mxu0
    %v320 = vadd.f32 0.0, %v319
    %v321 = vpop.f32.mrb[0].mxu0
    %322 = vmatprep.mubr.f32.mxu0 0.0
    %323 = vmatmul.mubr.f32.gmra.mrb[0].mxu0 %v250
    %v324 = vpop.f32.mrb[0].mxu0
    %v325 = vadd.f32 0.0, %v324
    %v326 = vpop.f32.mrb[0].mxu0
    %327 = vmatprep.mubr.f32.mxu0 0.0
    %328 = vmatmul.mubr.f32.gmra.mrb[0].mxu0 %v251
    %v329 = vpop.f32.mrb[0].mxu0
    %v330 = vadd.f32 0.0, %v329
    %v331 = vpop.f32.mrb[0].mxu0
    %332 = vmatprep.mubr.f32.mxu0 0.0
    %333 = vmatmul.mubr.f32.gmra.mrb[0].mxu0 %v252
    %v334 = vpop.f32.mrb[0].mxu0
    %v335 = vadd.f32 0.0, %v334
    %v336 = vpop.f32.mrb[0].mxu0
    %337 = vdwg.mxu0
    %v338 = vsub.f32 %v30, %v320
    %v339 = vsub.f32 %v31, %v325
    %v340 = vsub.f32 %v32, %v330
    %v341 = vsub.f32 %v33, %v335
    %v342 = vld [vmem:[%s4] sm:$0xff]
    %v343 = vld [vmem:[%s4 + $0x8] sm:$0xff]
    %v344 = vld [vmem:[%s4 + $0x10] sm:$0xff]
    %v345 = vld [vmem:[%s4 + $0x18] sm:$0xff]
    %v346 = vld [vmem:[%s4 + $0x20] sm:$0xff]
    %v347 = vld [vmem:[%s4 + $0x28] sm:$0xff]
    %v348 = vld [vmem:[%s4 + $0x30] sm:$0xff]
    %v349 = vld [vmem:[%s4 + $0x38] sm:$0xff]
    %v350 = vld [vmem:[%s4 + $0x40] sm:$0xff]
    %v351 = vld [vmem:[%s4 + $0x48] sm:$0xff]
    %v352 = vld [vmem:[%s4 + $0x50] sm:$0xff]
    %v353 = vld [vmem:[%s4 + $0x58] sm:$0xff]
    %v354 = vld [vmem:[%s4 + $0x60] sm:$0xff]
    %v355 = vld [vmem:[%s4 + $0x68] sm:$0xff]
    %v356 = vld [vmem:[%s4 + $0x70] sm:$0xff]
    %v357 = vld [vmem:[%s4 + $0x78] sm:$0xff]
    %v358 = vld [vmem:[%s5] sm:$0xff]
    %v359 = vld [vmem:[%s5 + $0x8] sm:$0xff]
    %v360 = vld [vmem:[%s5 + $0x10] sm:$0xff]
    %v361 = vld [vmem:[%s5 + $0x18] sm:$0xff]
    %v362 = vld [vmem:[%s6] sm:$0x1]
    %v364 = vsel %vm57, %v338, 0
    %v367 = vsel %vm57, %v339, 0
    %v370 = vsel %vm57, %v340, 0
    %v373 = vsel %vm57, %v341, 0
    %375 = vmatprep.subr.mxu0 0.0
    %376 = vmatpush1.msra.mxu0 %v358
    %377 = vmatprep.subr.mxu0 0.0
    %378 = vmatpush1.msra.mxu0 %v359
    %379 = vmatprep.subr.mxu0 0.0
    %380 = vmatpush1.msra.mxu0 %v360
    %381 = vmatprep.subr.mxu0 0.0
    %382 = vmatpush1.msra.mxu0 %v361
    %383 = vmatprep.subr.mxu0 0.0
    %384 = vmatpush1.msra.mxu0 0.0
    %385 = vmatprep.subr.mxu0 0.0
    %386 = vmatpush1.msra.mxu0 0.0
    %387 = vmatprep.subr.mxu0 0.0
    %388 = vmatpush1.msra.mxu0 0.0
    %389 = vmatprep.subr.mxu0 0.0
    %390 = vmatpush1.msra.mxu0 0.0
    %391 = vmatprep.subr.mxu0 0.0
    %392 = vmatpush1.msra.mxu0 0.0
    %393 = vmatprep.subr.mxu0 0.0
    %394 = vmatpush1.msra.mxu0 0.0
    %395 = vmatprep.subr.mxu0 0.0
    %396 = vmatpush1.msra.mxu0 0.0
    %397 = vmatprep.subr.mxu0 0.0
    %398 = vmatpush1.msra.mxu0 0.0
    %399 = vmatprep.subr.mxu0 0.0
    %400 = vmatpush1.msra.mxu0 0.0
    %401 = vmatprep.subr.mxu0 0.0
    %402 = vmatpush1.msra.mxu0 0.0
    %403 = vmatprep.subr.mxu0 0.0
    %404 = vmatpush1.msra.mxu0 0.0
    %405 = vmatprep.subr.mxu0 0.0
    %406 = vmatpush1.msra.mxu0 0.0
    %407 = vmatprep.subr.mxu0 0.0
    %408 = vmatpush1.msra.mxu0 0.0
    %409 = vmatprep.subr.mxu0 0.0
    %410 = vmatpush1.msra.mxu0 0.0
    %411 = vmatprep.subr.mxu0 0.0
    %412 = vmatpush1.msra.mxu0 0.0
    %413 = vmatprep.subr.mxu0 0.0
    %414 = vmatpush1.msra.mxu0 0.0
    %415 = vmatprep.subr.mxu0 0.0
    %416 = vmatpush1.msra.mxu0 0.0
    %417 = vmatprep.subr.mxu0 0.0
    %418 = vmatpush1.msra.mxu0 0.0
    %419 = vmatprep.subr.mxu0 0.0
    %420 = vmatpush1.msra.mxu0 0.0
    %421 = vmatprep.subr.mxu0 0.0
    %422 = vmatpush1.msra.mxu0 0.0
    %423 = vmatprep.subr.mxu0 0.0
    %424 = vmatpush1.msra.mxu0 0.0
    %425 = vmatprep.subr.mxu0 0.0
    %426 = vmatpush1.msra.mxu0 0.0
    %427 = vmatprep.subr.mxu0 0.0
    %428 = vmatpush1.msra.mxu0 0.0
    %429 = vmatprep.subr.mxu0 0.0
    %430 = vmatpush1.msra.mxu0 0.0
    %431 = vmatprep.subr.mxu0 0.0
    %432 = vmatpush1.msra.mxu0 0.0
    %433 = vmatprep.subr.mxu0 0.0
    %434 = vmatpush1.msra.mxu0 0.0
    %435 = vmatprep.subr.mxu0 0.0
    %436 = vmatpush1.msra.mxu0 0.0
    %437 = vmatprep.subr.mxu0 0.0
    %438 = vmatpush1.msra.mxu0 0.0
    %439 = vmatprep.mubr.f32.mxu0 0.0
    %440 = vmatmul.mubr.f32.gmra.mrb[0].mxu0 %v364
    %v441 = vpop.f32.mrb[0].mxu0
    %v442 = vadd.f32 0.0, %v441
    %v443 = vpop.f32.mrb[0].mxu0
    %444 = vmatprep.mubr.f32.mxu0 0.0
    %445 = vmatmul.mubr.f32.gmra.mrb[0].mxu0 %v367
    %v446 = vpop.f32.mrb[0].mxu0
    %v447 = vadd.f32 0.0, %v446
    %v448 = vpop.f32.mrb[0].mxu0
    %449 = vmatprep.mubr.f32.mxu0 0.0
    %450 = vmatmul.mubr.f32.gmra.mrb[0].mxu0 %v370
    %v451 = vpop.f32.mrb[0].mxu0
    %v452 = vadd.f32 0.0, %v451
    %v453 = vpop.f32.mrb[0].mxu0
    %454 = vmatprep.mubr.f32.mxu0 0.0
    %455 = vmatmul.mubr.f32.gmra.mrb[0].mxu0 %v373
    %v456 = vpop.f32.mrb[0].mxu0
    %v457 = vadd.f32 0.0, %v456
    %v458 = vpop.f32.mrb[0].mxu0
    %459 = vdwg.mxu0
    %v460 = vmul.f32 %v442, 2.0
    %v461 = vmul.f32 %v447, 2.0
    %v462 = vmul.f32 %v452, 2.0
    %v463 = vmul.f32 %v457, 2.0
    %v465 = vlaneseq
    %v466 = vshrl.u32 %v465, 7
    %v467 = vsub.s32 0, %v466
    %v468 = vrot.slane %v362, %v467
    %v470 = vsub.f32 %v468, %v460
    %v471 = vsub.f32 %v468, %v461
    %v472 = vsub.f32 %v468, %v462
    %v473 = vsub.f32 %v468, %v463
    %474 = vmin.xlane.f32.xlu0 %v470
    %v475 = vpop.xlane.xlu0 %474
    %476 = vmin.xlane.f32.xlu0 %v471
    %v477 = vpop.xlane.xlu0 %476
    %478 = vmin.xlane.f32.xlu0 %v472
    %v479 = vpop.xlane.xlu0 %478
    %480 = vmin.xlane.f32.xlu0 %v473
    %v481 = vpop.xlane.xlu0 %480
    %vm482 = vcmp.eq.f32.partialorder %v470, %v475
    %vm483 = vcmp.eq.f32.partialorder %v471, %v477
    %vm484 = vcmp.eq.f32.partialorder %v472, %v479
    %vm485 = vcmp.eq.f32.partialorder %v473, %v481
    %v486 = vsel %vm482, %v35, 128
    %v487 = vsel %vm483, %v35, 128
    %v488 = vsel %vm484, %v35, 128
    %v489 = vsel %vm485, %v35, 128
    %v490 = vand.u32 %v486, 65535
    %v491 = vshra.s32 %v486, 16
    %v492 = vcvt.s32.f32 %v490
    %v493 = vcvt.s32.f32 %v491
    %494 = vmin.xlane.f32.xlu0 %v493
    %v495 = vpop.xlane.xlu0 %494
    %vm496 = vcmp.eq.f32.partialorder %v493, %v495
    %v497 = vsel %vm496, %v492, inf
    %498 = vmin.xlane.f32.xlu0 %v497
    %v499 = vpop.xlane.xlu0 %498
    %v500 = vcvt.f32.s32 %v499
    %v501 = vcvt.f32.s32 %v495
    %v502 = vshll.u32 %v501, 16
    %v503 = vadd.s32 %v502, %v500
    %v504 = vand.u32 %v487, 65535
    %v505 = vshra.s32 %v487, 16
    %v506 = vcvt.s32.f32 %v504
    %v507 = vcvt.s32.f32 %v505
    %508 = vmin.xlane.f32.xlu0 %v507
    %v509 = vpop.xlane.xlu0 %508
    %vm510 = vcmp.eq.f32.partialorder %v507, %v509
    %v511 = vsel %vm510, %v506, inf
    %512 = vmin.xlane.f32.xlu0 %v511
    %v513 = vpop.xlane.xlu0 %512
    %v514 = vcvt.f32.s32 %v513
    %v515 = vcvt.f32.s32 %v509
    %v516 = vshll.u32 %v515, 16
    %v517 = vadd.s32 %v516, %v514
    %v518 = vand.u32 %v488, 65535
    %v519 = vshra.s32 %v488, 16
    %v520 = vcvt.s32.f32 %v518
    %v521 = vcvt.s32.f32 %v519
    %522 = vmin.xlane.f32.xlu0 %v521
    %v523 = vpop.xlane.xlu0 %522
    %vm524 = vcmp.eq.f32.partialorder %v521, %v523
    %v525 = vsel %vm524, %v520, inf
    %526 = vmin.xlane.f32.xlu0 %v525
    %v527 = vpop.xlane.xlu0 %526
    %v528 = vcvt.f32.s32 %v527
    %v529 = vcvt.f32.s32 %v523
    %v530 = vshll.u32 %v529, 16
    %v531 = vadd.s32 %v530, %v528
    %v532 = vand.u32 %v489, 65535
    %v533 = vshra.s32 %v489, 16
    %v534 = vcvt.s32.f32 %v532
    %v535 = vcvt.s32.f32 %v533
    %536 = vmin.xlane.f32.xlu0 %v535
    %v537 = vpop.xlane.xlu0 %536
    %vm538 = vcmp.eq.f32.partialorder %v535, %v537
    %v539 = vsel %vm538, %v534, inf
    %540 = vmin.xlane.f32.xlu0 %v539
    %v541 = vpop.xlane.xlu0 %540
    %v542 = vcvt.f32.s32 %v541
    %v543 = vcvt.f32.s32 %v537
    %v544 = vshll.u32 %v543, 16
    %v545 = vadd.s32 %v544, %v542
    %vm546 = vcmp.eq.s32.totalorder %v486, %v503
    %vm547 = vcmp.eq.s32.totalorder %v487, %v517
    %vm548 = vcmp.eq.s32.totalorder %v488, %v531
    %vm549 = vcmp.eq.s32.totalorder %v489, %v545
    %v550 = vsel %vm546, 1, 0
    %v551 = vsel %vm547, 1, 0
    %v552 = vsel %vm548, 1, 0
    %v553 = vsel %vm549, 1, 0
    %v554 = vcvt.s32.f32 %v550
    %v555 = vcvt.s32.f32 %v551
    %v556 = vcvt.s32.f32 %v552
    %v557 = vcvt.s32.f32 %v553
    %558 = vmatprep.subr.mxu0 0.0
    %559 = vmatpush1.msra.mxu0 %v342
    %560 = vmatprep.subr.mxu0 0.0
    %561 = vmatpush1.msra.mxu0 %v343
    %562 = vmatprep.subr.mxu0 0.0
    %563 = vmatpush1.msra.mxu0 %v344
    %564 = vmatprep.subr.mxu0 0.0
    %565 = vmatpush1.msra.mxu0 %v345
    %566 = vmatprep.subr.mxu0 0.0
    %567 = vmatpush1.msra.mxu0 %v346
    %568 = vmatprep.subr.mxu0 0.0
    %569 = vmatpush1.msra.mxu0 %v347
    %570 = vmatprep.subr.mxu0 0.0
    %571 = vmatpush1.msra.mxu0 %v348
    %572 = vmatprep.subr.mxu0 0.0
    %573 = vmatpush1.msra.mxu0 %v349
    %574 = vmatprep.subr.mxu0 0.0
    %575 = vmatpush1.msra.mxu0 %v350
    %576 = vmatprep.subr.mxu0 0.0
    %577 = vmatpush1.msra.mxu0 %v351
    %578 = vmatprep.subr.mxu0 0.0
    %579 = vmatpush1.msra.mxu0 %v352
    %580 = vmatprep.subr.mxu0 0.0
    %581 = vmatpush1.msra.mxu0 %v353
    %582 = vmatprep.subr.mxu0 0.0
    %583 = vmatpush1.msra.mxu0 %v354
    %584 = vmatprep.subr.mxu0 0.0
    %585 = vmatpush1.msra.mxu0 %v355
    %586 = vmatprep.subr.mxu0 0.0
    %587 = vmatpush1.msra.mxu0 %v356
    %588 = vmatprep.subr.mxu0 0.0
    %589 = vmatpush1.msra.mxu0 %v357
    %590 = vmatprep.subr.mxu0 0.0
    %591 = vmatpush1.msra.mxu0 0.0
    %592 = vmatprep.subr.mxu0 0.0
    %593 = vmatpush1.msra.mxu0 0.0
    %594 = vmatprep.subr.mxu0 0.0
    %595 = vmatpush1.msra.mxu0 0.0
    %596 = vmatprep.subr.mxu0 0.0
    %597 = vmatpush1.msra.mxu0 0.0
    %598 = vmatprep.subr.mxu0 0.0
    %599 = vmatpush1.msra.mxu0 0.0
    %600 = vmatprep.subr.mxu0 0.0
    %601 = vmatpush1.msra.mxu0 0.0
    %602 = vmatprep.subr.mxu0 0.0
    %603 = vmatpush1.msra.mxu0 0.0
    %604 = vmatprep.subr.mxu0 0.0
    %605 = vmatpush1.msra.mxu0 0.0
    %606 = vmatprep.subr.mxu0 0.0
    %607 = vmatpush1.msra.mxu0 0.0
    %608 = vmatprep.subr.mxu0 0.0
    %609 = vmatpush1.msra.mxu0 0.0
    %610 = vmatprep.subr.mxu0 0.0
    %611 = vmatpush1.msra.mxu0 0.0
    %612 = vmatprep.subr.mxu0 0.0
    %613 = vmatpush1.msra.mxu0 0.0
    %614 = vmatprep.subr.mxu0 0.0
    %615 = vmatpush1.msra.mxu0 0.0
    %616 = vmatprep.subr.mxu0 0.0
    %617 = vmatpush1.msra.mxu0 0.0
    %618 = vmatprep.subr.mxu0 0.0
    %619 = vmatpush1.msra.mxu0 0.0
    %620 = vmatprep.subr.mxu0 0.0
    %621 = vmatpush1.msra.mxu0 0.0
    %622 = vmatprep.mubr.f32.mxu0 0.0
    %623 = vmatmul.mubr.f32.gmra.mrb[0].mxu0 %v554
    %v624 = vpop.f32.mrb[0].mxu0
    %v625 = vadd.f32 0.0, %v624
    %v626 = vpop.f32.mrb[0].mxu0
    %627 = vmatprep.mubr.f32.mxu0 0.0
    %628 = vmatmul.mubr.f32.gmra.mrb[0].mxu0 %v555
    %v629 = vpop.f32.mrb[0].mxu0
    %v630 = vadd.f32 0.0, %v629
    %v631 = vpop.f32.mrb[0].mxu0
    %632 = vmatprep.mubr.f32.mxu0 0.0
    %633 = vmatmul.mubr.f32.gmra.mrb[0].mxu0 %v556
    %v634 = vpop.f32.mrb[0].mxu0
    %v635 = vadd.f32 0.0, %v634
    %v636 = vpop.f32.mrb[0].mxu0
    %637 = vmatprep.mubr.f32.mxu0 0.0
    %638 = vmatmul.mubr.f32.gmra.mrb[0].mxu0 %v557
    %v639 = vpop.f32.mrb[0].mxu0
    %v640 = vadd.f32 0.0, %v639
    %v641 = vpop.f32.mrb[0].mxu0
    %642 = vdwg.mxu0
    %v643 = vadd.f32 %v320, %v625
    %v644 = vadd.f32 %v325, %v630
    %v645 = vadd.f32 %v330, %v635
    %v646 = vadd.f32 %v335, %v640
    %647 = vst.msk [vmem:[#allocation2] sm:$0xff] %vm57, %v643
    %648 = vst.msk [vmem:[#allocation2 + $0x8] sm:$0xff] %vm57, %v644
    %649 = vst.msk [vmem:[#allocation2 + $0x10] sm:$0xff] %vm57, %v645
    %650 = vst.msk [vmem:[#allocation2 + $0x18] sm:$0xff] %vm57, %v646
    %v651 = vsub.f32 %v643, %v30
    %v652 = vsub.f32 %v644, %v31
    %v653 = vsub.f32 %v645, %v32
    %v654 = vsub.f32 %v646, %v33
    %v655 = vmul.f32 %v651, %v651
    %v656 = vmul.f32 %v652, %v652
    %v657 = vmul.f32 %v653, %v653
    %v658 = vmul.f32 %v654, %v654
    %v659 = vsel %vm57, %v655, 0.0
    %660 = vadd.xlane.f32.xlu0 %v659
    %v661 = vpop.xlane.xlu0 %660
    %v662 = vsel %vm57, %v656, 0.0
    %663 = vadd.xlane.f32.xlu0 %v662
    %v664 = vpop.xlane.xlu0 %663
    %v665 = vsel %vm57, %v657, 0.0
    %666 = vadd.xlane.f32.xlu0 %v665
    %v667 = vpop.xlane.xlu0 %666
    %v668 = vsel %vm57, %v658, 0.0
    %669 = vadd.xlane.f32.xlu0 %v668
    %v670 = vpop.xlane.xlu0 %669
    %vm671 = vcmask 7168
    %v672 = vsel %vm671, %v661, 0.0
    %v673 = vsel %vm671, %v664, 0.0
    %v674 = vadd.f32 %v672, %v673
    %v675 = vsel %vm671, %v667, 0.0
    %v676 = vadd.f32 %v674, %v675
    %v677 = vsel %vm671, %v670, 0.0
    %v678 = vadd.f32 %v676, %v677
    %679 = vadd.xlane.f32.xlu0 %v678
    %v680 = vpop.xlane.xlu0 %679
    %v681 = vrot.slane %v680, 4
    %v682 = vadd.f32 %v680, %v681
    %v683 = vrot.slane %v682, 2
    %v684 = vadd.f32 %v682, %v683
    %v685 = vrot.slane %v684, 1
    %v686 = vadd.f32 %v684, %v685
    %s687 = vtos %v686
    %s688 = scalar_lea.smem [#allocation5], 0
    %689 = sst [smem:[%s688]] %s687
    // Predicated region
    $region30: #{tpu_custom_call.1} parent=1 // pred_check
      _
    $region31: #{tpu_custom_call.1} parent=1 // pred_check_branch
      %691 = sbr.rel (0) target = $region33
    $region32: #{tpu_custom_call.1} parent=1 // pred_region
      %s693 = ssub.s32 512, 512
      %694 = vsyncadd [#allocation3], %s693
      %s695 = sshll.u32 [#allocation2], 4
      %s696 = int_to_ptr.vmem [resolvable:$true] %s695
      %701 = dma.vmem_to_hbm [thread:$0]  %s696, 512, %s7, [#allocation3], 128, 128, 8
    $region33: #{tpu_custom_call.1} parent=1 // pred_fallthru
      _
    // Predicated region
    $region34: #{tpu_custom_call.1} parent=1 // pred_check
      _
    $region35: #{tpu_custom_call.1} parent=1 // pred_check_branch
      %703 = sbr.rel (0) target = $region37
    $region36: #{tpu_custom_call.1} parent=1 // pred_region
      %s705 = ssub.s32 16, 16
      %706 = vsyncadd [#allocation4], %s705
      %709 = dma.smem_to_hbm [#allocation5], 16, %s8, [#allocation4]
    $region37: #{tpu_custom_call.1} parent=1 // pred_fallthru
      _
    // Predicated region
    $region38: #{tpu_custom_call.1} parent=1 // pred_check
      _
    $region39: #{tpu_custom_call.1} parent=1 // pred_check_branch
      %711 = sbr.rel (0) target = $region41
    $region40: #{tpu_custom_call.1} parent=1 // pred_region
      %712 = dma.done [#allocation3], 512
    $region41: #{tpu_custom_call.1} parent=1 // pred_fallthru
      _
    // Predicated region
    $region42: #{tpu_custom_call.1} parent=1 // pred_check
      _
    $region43: #{tpu_custom_call.1} parent=1 // pred_check_branch
      %714 = sbr.rel (0) target = $region45
    $region44: #{tpu_custom_call.1} parent=1 // pred_region
      %715 = dma.done [#allocation4], 16
    $region45: #{tpu_custom_call.1} parent=1 // pred_fallthru
      _
    %716 = sfence
    %717 = vsyncpa [#allocation3], 1
    %718 = vsyncpa [#allocation4], 1

</llo_original>
